<compile_context>
chip_gen: v6e
topology: v6e:2x2x1
jax: 0.10.0
libtpu: 0.0.40
codegen_flags: <defaults>
</compile_context>

<pallas_src>
import jax
import jax.numpy as jnp
from jax import lax
from jax.experimental import pallas as pl
from jax.experimental.pallas import tpu as pltpu


CLAMP_MIN = -123.68
CLAMP_MAX = 151.061


def neural_texture_forward(data, x, *, tile_p=1024, fuse_hw=None,
                           single_buffer_texture=True):
    """data: (C, H, W) texture parameter.  x: (N, Ho, Wo, 2) sampling grid.
    Returns y: (N, C, Ho, Wo), matching NeuralTexture.forward."""
    C, H, W = data.shape
    N, Ho, Wo, two = x.shape
    assert two == 2
    P_img = Ho * Wo

    # Lane alignment: per-image pixel tile must be a multiple of 128.
    tile_p = max(128, (int(tile_p) // 128) * 128)
    tile_eff = min(tile_p, ((P_img + 127) // 128) * 128)
    num_tiles = -(-P_img // tile_eff)
    P_pad = num_tiles * tile_eff

    # (N, Ho, Wo, 2) -> (N, 2, P_pad): pixels on the lane axis, per image.
    # (Input transpose touches only 2 floats/pixel; output is written NCHW
    #  directly by the kernel so no output transpose is needed.)
    grid_arr = jnp.transpose(x.reshape(N, P_img, 2), (0, 2, 1)).astype(jnp.float32)
    if P_pad != P_img:
        grid_arr = jnp.pad(grid_arr, ((0, 0), (0, 0), (0, P_pad - P_img)))

    # normalize(): clamp ONCE in the wrapper, not per grid step.
    tex = jnp.clip(data.astype(jnp.float32), CLAMP_MIN, CLAMP_MAX)

    # Fused (C, H*W) matmul pays H*W*TP extra VALU mults to fill the MXU's K
    # dimension — only worth it when C is not small relative to W.
    fuse = fuse_hw if fuse_hw is not None else (C >= W and H * W <= 2048)
    tex2d = tex.reshape(C, H * W) if fuse else tex.reshape(C * H, W)

    # ---- kernels (closures over C, H, W) --------------------------------
    def _bilinear_weights(g):
        """g: (2, TP) f32, row 0 = x/width coord, row 1 = y/height coord.
        Returns transposed one-hot bilinear weights wx_t (W, TP), wy_t (H, TP)."""
        TP = g.shape[1]
        # align_corners=True unnormalization + 'border' clamp, both rows at once.
        row = lax.broadcasted_iota(jnp.int32, g.shape, 0)
        size_m1_i = jnp.where(row == 0, jnp.int32(W - 1), jnp.int32(H - 1))
        size_m1_f = size_m1_i.astype(jnp.float32)
        p = jnp.clip((g + 1.0) * 0.5 * size_m1_f, 0.0, size_m1_f)
        p0 = jnp.floor(p)
        f = p - p0
        p0i = p0.astype(jnp.int32)
        p1i = jnp.minimum(p0i + 1, size_m1_i)

        x0i, y0i = p0i[0:1, :], p0i[1:2, :]
        x1i, y1i = p1i[0:1, :], p1i[1:2, :]
        fx, fy = f[0:1, :], f[1:2, :]

        # Two nonzeros per pixel column; collapses to a single weight-1 entry
        # at the clamped border (x0 == x1 / y0 == y1).
        iota_w = lax.broadcasted_iota(jnp.int32, (W, TP), 0)
        iota_h = lax.broadcasted_iota(jnp.int32, (H, TP), 0)
        wx_t = (jnp.where(iota_w == x0i, 1.0 - fx, 0.0)
                + jnp.where(iota_w == x1i, fx, 0.0))
        wy_t = (jnp.where(iota_h == y0i, 1.0 - fy, 0.0)
                + jnp.where(iota_h == y1i, fy, 0.0))
        return wx_t, wy_t

    def _kernel_two_stage(grid_ref, tex_ref, out_ref):
        # grid_ref: (1, 2, TP); tex_ref: (C*H, W); out_ref: (1, C, TP)
        wx_t, wy_t = _bilinear_weights(grid_ref[0])
        TP = wx_t.shape[1]
        # W-interp on the MXU: (C*H, W) @ (W, TP) -> (C*H, TP);
        # H-interp: broadcast multiply + sublane-axis reduce.
        tmp = jnp.dot(tex_ref[...], wx_t, preferred_element_type=jnp.float32)
        tmp = tmp.reshape(C, H, TP) * wy_t[None, :, :]
        out_ref[0] = jnp.sum(tmp, axis=1).astype(out_ref.dtype)

    def _kernel_fused(grid_ref, tex_ref, out_ref):
        # grid_ref: (1, 2, TP); tex_ref: (C, H*W); out_ref: (1, C, TP)
        wx_t, wy_t = _bilinear_weights(grid_ref[0])
        TP = wx_t.shape[1]
        # Outer-product one-hot weight, single MXU matmul with K = H*W.
        w_hw = (wy_t[:, None, :] * wx_t[None, :, :]).reshape(H * W, TP)
        out_ref[0] = jnp.dot(tex_ref[...], w_hw,
                             preferred_element_type=jnp.float32).astype(out_ref.dtype)

    kernel = _kernel_fused if fuse else _kernel_two_stage

    # ---- VMEM accounting (with (8,128) layout padding) -------------------
    def _padded_bytes(rows, cols, itemsize=4):
        return (-(-rows // 8) * 8) * (-(-cols // 128) * 128) * itemsize

    tex_rows, tex_cols = tex2d.shape
    tex_copies = 1 if single_buffer_texture else 2
    tex_bytes = tex_copies * _padded_bytes(tex_rows, tex_cols)
    io_bytes = 2 * (_padded_bytes(2, tile_eff) + _padded_bytes(C, tile_eff))
    # In-kernel temporaries: coord math on (2, TP), one-hot weights, interp tmp.
    tmp_bytes = (8 * _padded_bytes(2, tile_eff)
                 + 3 * (_padded_bytes(W, tile_eff) + _padded_bytes(H, tile_eff))
                 + _padded_bytes(C, tile_eff))
    tmp_bytes += 2 * (_padded_bytes(H * W, tile_eff) if fuse
                      else _padded_bytes(C * H, tile_eff))
    vmem_need = tex_bytes + io_bytes + tmp_bytes + (2 << 20)

    try:
        phys_vmem = int(pltpu.get_tpu_info().vmem_capacity_bytes)
    except Exception:
        phys_vmem = 64 * 1024 * 1024  # conservative (v7x per-TC VMEM)
    vmem_cap = int(phys_vmem * 0.85)  # leave headroom for Pallas internal scratch
    vmem_limit = int(min(max(vmem_need, 16 * 1024 * 1024), vmem_cap))
    # TODO(synk): if vmem_need > vmem_cap (very large textures), fall back to an
    # H-blocked accumulator path instead of keeping the whole texture resident.

    # ---- pallas_call ------------------------------------------------------
    def _call(single_buf):
        if single_buf:
            tex_spec = pl.BlockSpec((tex_rows, tex_cols), lambda n, i: (0, 0),
                                    pipeline_mode=pl.Buffered(1))
        else:
            tex_spec = pl.BlockSpec((tex_rows, tex_cols), lambda n, i: (0, 0))
        return pl.pallas_call(
            kernel,
            out_shape=jax.ShapeDtypeStruct((N, C, P_pad), jnp.float32),
            grid=(N, num_tiles),
            in_specs=[
                pl.BlockSpec((1, 2, tile_eff), lambda n, i: (n, 0, i)),
                tex_spec,
            ],
            out_specs=pl.BlockSpec((1, C, tile_eff), lambda n, i: (n, 0, i)),
            compiler_params=pltpu.CompilerParams(
                dimension_semantics=("parallel", "parallel"),
                vmem_limit_bytes=vmem_limit),
        )(grid_arr, tex2d)

    if single_buffer_texture:
        try:
            out = _call(True)
        except Exception:
            # Older JAX may reject pipeline_mode / buffer_count=1 — fall back.
            out = _call(False)
    else:
        out = _call(False)

    # (N, C, P_pad) -> (N, C, Ho, Wo): already NCHW-ordered, no transpose.
    return out[:, :, :P_img].reshape(N, C, Ho, Wo)


def _grid_sample_ref(data, x):
    """Pure-JAX reference: clamp + grid_sample(bilinear, border, align_corners=True)."""
    C, H, W = data.shape
    d = jnp.clip(data, CLAMP_MIN, CLAMP_MAX)
    gx, gy = x[..., 0], x[..., 1]
    px = jnp.clip((gx + 1.0) * 0.5 * (W - 1), 0.0, W - 1)
    py = jnp.clip((gy + 1.0) * 0.5 * (H - 1), 0.0, H - 1)
    x0 = jnp.floor(px).astype(jnp.int32)
    y0 = jnp.floor(py).astype(jnp.int32)
    x1 = jnp.minimum(x0 + 1, W - 1)
    y1 = jnp.minimum(y0 + 1, H - 1)
    fx = px - x0
    fy = py - y0

    def g(yi, xi):
        return d[:, yi, xi]  # (C, N, Ho, Wo)

    out = (g(y0, x0) * (1 - fx) * (1 - fy)
           + g(y0, x1) * fx * (1 - fy)
           + g(y1, x0) * (1 - fx) * fy
           + g(y1, x1) * fx * fy)
    return jnp.transpose(out, (1, 0, 2, 3))  # (N, C, Ho, Wo)


if __name__ == "__main__":
    key = jax.random.PRNGKey(0)
    k_tex, k_grid = jax.random.split(key)

    # NeuralTexture(W=16, H=16, C=4, random_init=True)
    C, H, W = 4, 16, 16
    N, Ho, Wo = 2, 8, 8

    data = jax.random.uniform(k_tex, (C, H, W), dtype=jnp.float32)
    # Sampling grid in [-1.2, 1.2] to exercise the 'border' padding path too.
    x = jax.random.uniform(k_grid, (N, Ho, Wo, 2), dtype=jnp.float32,
                           minval=-1.2, maxval=1.2)

    y_ref = _grid_sample_ref(data, x)

    # Default path: (C*H, W) @ (W, TP) two-stage interpolation.
    y = jax.block_until_ready(neural_texture_forward(data, x))
    assert y.shape == (N, C, Ho, Wo)
    assert jnp.allclose(y, y_ref, atol=1e-5, rtol=1e-5), "two-stage mismatch vs reference"

    # Fused (C, H*W) single-matmul variant (v6e/v7x path for C >~ W).
    y_fused = jax.block_until_ready(neural_texture_forward(data, x, fuse_hw=True))
    assert jnp.allclose(y_fused, y_ref, atol=1e-5, rtol=1e-5), "fused mismatch vs reference"

    print("KERNEL_OK")
</pallas_src>

<mosaic_0001>
module attributes {stable_mosaic.version = 11 : i64} {
  func.func @_kernel_two_stage(%arg0: i32, %arg1: i32, %arg2: memref<1x2x128xf32, #tpu.memory_space<vmem>>, %arg3: memref<64x16xf32, #tpu.memory_space<vmem>>, %arg4: memref<1x4x128xf32, #tpu.memory_space<vmem>>) attributes {dimension_semantics = [#tpu.dimension_semantics<parallel>, #tpu.dimension_semantics<parallel>], iteration_bounds = array<i64: 2, 1>, scalar_prefetch = 0 : i64, scratch_operands = 0 : i64, tpu.core_type = #tpu.core_type<tc>, window_params = [{transform_indices = @transform_0, window_bounds = array<i64: 1, 2, 128>}, {pipeline_mode = #tpu.pipeline_mode<synchronous>, transform_indices = @transform_1, window_bounds = array<i64: 64, 16>}, {transform_indices = @transform_2, window_bounds = array<i64: 1, 4, 128>}]} {
    %c0 = arith.constant 0 : index
    %c0_0 = arith.constant 0 : index
    %c0_1 = arith.constant 0 : index
    %0 = vector.load %arg2[%c0, %c0_0, %c0_1] : memref<1x2x128xf32, #tpu.memory_space<vmem>>, vector<1x2x128xf32>
    %1 = vector.shape_cast %0 : vector<1x2x128xf32> to vector<2x128xf32>
    %2 = tpu.iota {dimensions = array<i32: 0>} : vector<2x128xi32>
    %c0_i32 = arith.constant 0 : i32
    %3 = vector.broadcast %c0_i32 : i32 to vector<2x128xi32>
    %4 = arith.cmpi eq, %2, %3 : vector<2x128xi32>
    %c15_i32 = arith.constant 15 : i32
    %c15_i32_2 = arith.constant 15 : i32
    %5 = vector.broadcast %c15_i32 : i32 to vector<2x128xi32>
    %6 = vector.broadcast %c15_i32_2 : i32 to vector<2x128xi32>
    %7 = arith.select %4, %5, %6 : vector<2x128xi1>, vector<2x128xi32>
    %8 = arith.sitofp %7 : vector<2x128xi32> to vector<2x128xf32>
    %cst = arith.constant 1.000000e+00 : f32
    %9 = vector.broadcast %cst : f32 to vector<2x128xf32>
    %10 = arith.addf %1, %9 : vector<2x128xf32>
    %cst_3 = arith.constant 5.000000e-01 : f32
    %11 = vector.broadcast %cst_3 : f32 to vector<2x128xf32>
    %12 = arith.mulf %10, %11 : vector<2x128xf32>
    %13 = arith.mulf %12, %8 : vector<2x128xf32>
    %cst_4 = arith.constant 0.000000e+00 : f32
    %14 = vector.broadcast %cst_4 : f32 to vector<2x128xf32>
    %15 = arith.maximumf %14, %13 : vector<2x128xf32>
    %16 = arith.minimumf %8, %15 : vector<2x128xf32>
    %17 = math.floor %16 : vector<2x128xf32>
    %18 = arith.subf %16, %17 : vector<2x128xf32>
    %19 = arith.fptosi %17 : vector<2x128xf32> to vector<2x128xi32>
    %c1_i32 = arith.constant 1 : i32
    %20 = vector.broadcast %c1_i32 : i32 to vector<2x128xi32>
    %21 = arith.addi %19, %20 : vector<2x128xi32>
    %22 = arith.minsi %21, %7 : vector<2x128xi32>
    %23 = vector.extract_strided_slice %19 {offsets = [0, 0], sizes = [1, 128], strides = [1, 1]} : vector<2x128xi32> to vector<1x128xi32>
    %24 = vector.extract_strided_slice %19 {offsets = [1, 0], sizes = [1, 128], strides = [1, 1]} : vector<2x128xi32> to vector<1x128xi32>
    %25 = vector.extract_strided_slice %22 {offsets = [0, 0], sizes = [1, 128], strides = [1, 1]} : vector<2x128xi32> to vector<1x128xi32>
    %26 = vector.extract_strided_slice %22 {offsets = [1, 0], sizes = [1, 128], strides = [1, 1]} : vector<2x128xi32> to vector<1x128xi32>
    %27 = vector.extract_strided_slice %18 {offsets = [0, 0], sizes = [1, 128], strides = [1, 1]} : vector<2x128xf32> to vector<1x128xf32>
    %28 = vector.extract_strided_slice %18 {offsets = [1, 0], sizes = [1, 128], strides = [1, 1]} : vector<2x128xf32> to vector<1x128xf32>
    %29 = tpu.iota {dimensions = array<i32: 0>} : vector<16x128xi32>
    %30 = tpu.iota {dimensions = array<i32: 0>} : vector<16x128xi32>
    %31 = vector.broadcast %23 : vector<1x128xi32> to vector<16x128xi32>
    %32 = arith.cmpi eq, %29, %31 : vector<16x128xi32>
    %cst_5 = arith.constant 1.000000e+00 : f32
    %33 = vector.broadcast %cst_5 : f32 to vector<1x128xf32>
    %34 = arith.subf %33, %27 : vector<1x128xf32>
    %cst_6 = arith.constant 0.000000e+00 : f32
    %35 = vector.shape_cast %34 : vector<1x128xf32> to vector<1x128xf32>
    %36 = vector.broadcast %35 : vector<1x128xf32> to vector<16x128xf32>
    %37 = vector.broadcast %cst_6 : f32 to vector<16x128xf32>
    %38 = arith.select %32, %36, %37 : vector<16x128xi1>, vector<16x128xf32>
    %39 = vector.broadcast %25 : vector<1x128xi32> to vector<16x128xi32>
    %40 = arith.cmpi eq, %29, %39 : vector<16x128xi32>
    %cst_7 = arith.constant 0.000000e+00 : f32
    %41 = vector.shape_cast %27 : vector<1x128xf32> to vector<1x128xf32>
    %42 = vector.broadcast %41 : vector<1x128xf32> to vector<16x128xf32>
    %43 = vector.broadcast %cst_7 : f32 to vector<16x128xf32>
    %44 = arith.select %40, %42, %43 : vector<16x128xi1>, vector<16x128xf32>
    %45 = arith.addf %38, %44 : vector<16x128xf32>
    %46 = vector.broadcast %24 : vector<1x128xi32> to vector<16x128xi32>
    %47 = arith.cmpi eq, %30, %46 : vector<16x128xi32>
    %cst_8 = arith.constant 1.000000e+00 : f32
    %48 = vector.broadcast %cst_8 : f32 to vector<1x128xf32>
    %49 = arith.subf %48, %28 : vector<1x128xf32>
    %cst_9 = arith.constant 0.000000e+00 : f32
    %50 = vector.shape_cast %49 : vector<1x128xf32> to vector<1x128xf32>
    %51 = vector.broadcast %50 : vector<1x128xf32> to vector<16x128xf32>
    %52 = vector.broadcast %cst_9 : f32 to vector<16x128xf32>
    %53 = arith.select %47, %51, %52 : vector<16x128xi1>, vector<16x128xf32>
    %54 = vector.broadcast %26 : vector<1x128xi32> to vector<16x128xi32>
    %55 = arith.cmpi eq, %30, %54 : vector<16x128xi32>
    %cst_10 = arith.constant 0.000000e+00 : f32
    %56 = vector.shape_cast %28 : vector<1x128xf32> to vector<1x128xf32>
    %57 = vector.broadcast %56 : vector<1x128xf32> to vector<16x128xf32>
    %58 = vector.broadcast %cst_10 : f32 to vector<16x128xf32>
    %59 = arith.select %55, %57, %58 : vector<16x128xi1>, vector<16x128xf32>
    %60 = arith.addf %53, %59 : vector<16x128xf32>
    %c0_11 = arith.constant 0 : index
    %c0_12 = arith.constant 0 : index
    %61 = vector.load %arg3[%c0_11, %c0_12] : memref<64x16xf32, #tpu.memory_space<vmem>>, vector<64x16xf32>
    %cst_13 = arith.constant dense<0.000000e+00> : vector<64x128xf32>
    %62 = tpu.matmul %61, %45, %cst_13 {dimension_numbers = #tpu.dot_dimension_numbers<[1], [0], [0], [1], [0, 0, 1, 1], [], []>} : vector<64x16xf32>, vector<16x128xf32>, vector<64x128xf32> -> vector<64x128xf32>
    %63 = vector.shape_cast %62 : vector<64x128xf32> to vector<4x16x128xf32>
    %64 = vector.shape_cast %60 : vector<16x128xf32> to vector<1x16x128xf32>
    %65 = vector.broadcast %64 : vector<1x16x128xf32> to vector<4x16x128xf32>
    %66 = arith.mulf %63, %65 : vector<4x16x128xf32>
    %cst_14 = arith.constant dense<0.000000e+00> : vector<4x128xf32>
    %67 = vector.multi_reduction <add>, %66, %cst_14 [1] : vector<4x16x128xf32> to vector<4x128xf32>
    %c0_15 = arith.constant 0 : index
    %c0_16 = arith.constant 0 : index
    %c0_17 = arith.constant 0 : index
    %68 = vector.load %arg4[%c0_15, %c0_16, %c0_17] : memref<1x4x128xf32, #tpu.memory_space<vmem>>, vector<1x4x128xf32>
    %69 = vector.shape_cast %68 : vector<1x4x128xf32> to vector<4x128xf32>
    %70 = vector.shape_cast %67 : vector<4x128xf32> to vector<1x4x128xf32>
    tpu.vector_store %arg4[%c0_15, %c0_16, %c0_17], %70 {strides = array<i32>} : memref<1x4x128xf32, #tpu.memory_space<vmem>>, vector<1x4x128xf32>,
    return
  }
  func.func @transform_0(%arg0: i32, %arg1: i32) -> (i32, i32, i32) {
    %c0_i32 = arith.constant 0 : i32
    %c0_i32_0 = arith.constant 0 : i32
    return %arg0, %c0_i32, %arg1 : i32, i32, i32
  }
  func.func @transform_1(%arg0: i32, %arg1: i32) -> (i32, i32) {
    %c0_i32 = arith.constant 0 : i32
    %c0_i32_0 = arith.constant 0 : i32
    %c0_i32_1 = arith.constant 0 : i32
    return %c0_i32, %c0_i32_0 : i32, i32
  }
  func.func @transform_2(%arg0: i32, %arg1: i32) -> (i32, i32, i32) {
    %c0_i32 = arith.constant 0 : i32
    %c0_i32_0 = arith.constant 0 : i32
    return %arg0, %c0_i32, %arg1 : i32, i32, i32
  }
}

module attributes {stable_mosaic.version = 11 : i64} {
  func.func @_kernel_two_stage(%arg0: i32, %arg1: i32, %arg2: memref<1x2x128xf32, #tpu.memory_space<vmem>>, %arg3: memref<64x16xf32, #tpu.memory_space<vmem>>, %arg4: memref<1x4x128xf32, #tpu.memory_space<vmem>>) attributes {dimension_semantics = [#tpu.dimension_semantics<parallel>, #tpu.dimension_semantics<parallel>], iteration_bounds = array<i64: 2, 1>, scalar_prefetch = 0 : i64, scratch_operands = 0 : i64, tpu.core_type = #tpu.core_type<tc>, window_params = [{transform_indices = @transform_0, window_bounds = array<i64: 1, 2, 128>}, {pipeline_mode = #tpu.pipeline_mode<synchronous>, transform_indices = @transform_1, window_bounds = array<i64: 64, 16>}, {transform_indices = @transform_2, window_bounds = array<i64: 1, 4, 128>}]} {
    %c0 = arith.constant 0 : index
    %c0_0 = arith.constant 0 : index
    %c0_1 = arith.constant 0 : index
    %0 = vector.load %arg2[%c0, %c0_0, %c0_1] : memref<1x2x128xf32, #tpu.memory_space<vmem>>, vector<1x2x128xf32>
    %1 = vector.shape_cast %0 : vector<1x2x128xf32> to vector<2x128xf32>
    %2 = tpu.iota {dimensions = array<i32: 0>} : vector<2x128xi32>
    %c0_i32 = arith.constant 0 : i32
    %3 = vector.broadcast %c0_i32 : i32 to vector<2x128xi32>
    %4 = arith.cmpi eq, %2, %3 : vector<2x128xi32>
    %c15_i32 = arith.constant 15 : i32
    %c15_i32_2 = arith.constant 15 : i32
    %5 = vector.broadcast %c15_i32 : i32 to vector<2x128xi32>
    %6 = vector.broadcast %c15_i32_2 : i32 to vector<2x128xi32>
    %7 = arith.select %4, %5, %6 : vector<2x128xi1>, vector<2x128xi32>
    %8 = arith.sitofp %7 : vector<2x128xi32> to vector<2x128xf32>
    %cst = arith.constant 1.000000e+00 : f32
    %9 = vector.broadcast %cst : f32 to vector<2x128xf32>
    %10 = arith.addf %1, %9 : vector<2x128xf32>
    %cst_3 = arith.constant 5.000000e-01 : f32
    %11 = vector.broadcast %cst_3 : f32 to vector<2x128xf32>
    %12 = arith.mulf %10, %11 : vector<2x128xf32>
    %13 = arith.mulf %12, %8 : vector<2x128xf32>
    %cst_4 = arith.constant 0.000000e+00 : f32
    %14 = vector.broadcast %cst_4 : f32 to vector<2x128xf32>
    %15 = arith.maximumf %14, %13 : vector<2x128xf32>
    %16 = arith.minimumf %8, %15 : vector<2x128xf32>
    %17 = math.floor %16 : vector<2x128xf32>
    %18 = arith.subf %16, %17 : vector<2x128xf32>
    %19 = arith.fptosi %17 : vector<2x128xf32> to vector<2x128xi32>
    %c1_i32 = arith.constant 1 : i32
    %20 = vector.broadcast %c1_i32 : i32 to vector<2x128xi32>
    %21 = arith.addi %19, %20 : vector<2x128xi32>
    %22 = arith.minsi %21, %7 : vector<2x128xi32>
    %23 = vector.extract_strided_slice %19 {offsets = [0, 0], sizes = [1, 128], strides = [1, 1]} : vector<2x128xi32> to vector<1x128xi32>
    %24 = vector.extract_strided_slice %19 {offsets = [1, 0], sizes = [1, 128], strides = [1, 1]} : vector<2x128xi32> to vector<1x128xi32>
    %25 = vector.extract_strided_slice %22 {offsets = [0, 0], sizes = [1, 128], strides = [1, 1]} : vector<2x128xi32> to vector<1x128xi32>
    %26 = vector.extract_strided_slice %22 {offsets = [1, 0], sizes = [1, 128], strides = [1, 1]} : vector<2x128xi32> to vector<1x128xi32>
    %27 = vector.extract_strided_slice %18 {offsets = [0, 0], sizes = [1, 128], strides = [1, 1]} : vector<2x128xf32> to vector<1x128xf32>
    %28 = vector.extract_strided_slice %18 {offsets = [1, 0], sizes = [1, 128], strides = [1, 1]} : vector<2x128xf32> to vector<1x128xf32>
    %29 = tpu.iota {dimensions = array<i32: 0>} : vector<16x128xi32>
    %30 = tpu.iota {dimensions = array<i32: 0>} : vector<16x128xi32>
    %31 = vector.broadcast %23 : vector<1x128xi32> to vector<16x128xi32>
    %32 = arith.cmpi eq, %29, %31 : vector<16x128xi32>
    %cst_5 = arith.constant 1.000000e+00 : f32
    %33 = vector.broadcast %cst_5 : f32 to vector<1x128xf32>
    %34 = arith.subf %33, %27 : vector<1x128xf32>
    %cst_6 = arith.constant 0.000000e+00 : f32
    %35 = vector.shape_cast %34 : vector<1x128xf32> to vector<1x128xf32>
    %36 = vector.broadcast %35 : vector<1x128xf32> to vector<16x128xf32>
    %37 = vector.broadcast %cst_6 : f32 to vector<16x128xf32>
    %38 = arith.select %32, %36, %37 : vector<16x128xi1>, vector<16x128xf32>
    %39 = vector.broadcast %25 : vector<1x128xi32> to vector<16x128xi32>
    %40 = arith.cmpi eq, %29, %39 : vector<16x128xi32>
    %cst_7 = arith.constant 0.000000e+00 : f32
    %41 = vector.shape_cast %27 : vector<1x128xf32> to vector<1x128xf32>
    %42 = vector.broadcast %41 : vector<1x128xf32> to vector<16x128xf32>
    %43 = vector.broadcast %cst_7 : f32 to vector<16x128xf32>
    %44 = arith.select %40, %42, %43 : vector<16x128xi1>, vector<16x128xf32>
    %45 = arith.addf %38, %44 : vector<16x128xf32>
    %46 = vector.broadcast %24 : vector<1x128xi32> to vector<16x128xi32>
    %47 = arith.cmpi eq, %30, %46 : vector<16x128xi32>
    %cst_8 = arith.constant 1.000000e+00 : f32
    %48 = vector.broadcast %cst_8 : f32 to vector<1x128xf32>
    %49 = arith.subf %48, %28 : vector<1x128xf32>
    %cst_9 = arith.constant 0.000000e+00 : f32
    %50 = vector.shape_cast %49 : vector<1x128xf32> to vector<1x128xf32>
    %51 = vector.broadcast %50 : vector<1x128xf32> to vector<16x128xf32>
    %52 = vector.broadcast %cst_9 : f32 to vector<16x128xf32>
    %53 = arith.select %47, %51, %52 : vector<16x128xi1>, vector<16x128xf32>
    %54 = vector.broadcast %26 : vector<1x128xi32> to vector<16x128xi32>
    %55 = arith.cmpi eq, %30, %54 : vector<16x128xi32>
    %cst_10 = arith.constant 0.000000e+00 : f32
    %56 = vector.shape_cast %28 : vector<1x128xf32> to vector<1x128xf32>
    %57 = vector.broadcast %56 : vector<1x128xf32> to vector<16x128xf32>
    %58 = vector.broadcast %cst_10 : f32 to vector<16x128xf32>
    %59 = arith.select %55, %57, %58 : vector<16x128xi1>, vector<16x128xf32>
    %60 = arith.addf %53, %59 : vector<16x128xf32>
    %c0_11 = arith.constant 0 : index
    %c0_12 = arith.constant 0 : index
    %61 = vector.load %arg3[%c0_11, %c0_12] : memref<64x16xf32, #tpu.memory_space<vmem>>, vector<64x16xf32>
    %cst_13 = arith.constant dense<0.000000e+00> : vector<64x128xf32>
    %62 = tpu.matmul %61, %45, %cst_13 {dimension_numbers = #tpu.dot_dimension_numbers<[1], [0], [0], [1], [0, 0, 1, 1], [], []>} : vector<64x16xf32>, vector<16x128xf32>, vector<64x128xf32> -> vector<64x128xf32>
    %63 = vector.shape_cast %62 : vector<64x128xf32> to vector<4x16x128xf32>
    %64 = vector.shape_cast %60 : vector<16x128xf32> to vector<1x16x128xf32>
    %65 = vector.broadcast %64 : vector<1x16x128xf32> to vector<4x16x128xf32>
    %66 = arith.mulf %63, %65 : vector<4x16x128xf32>
    %cst_14 = arith.constant dense<0.000000e+00> : vector<4x128xf32>
    %67 = vector.multi_reduction <add>, %66, %cst_14 [1] : vector<4x16x128xf32> to vector<4x128xf32>
    %c0_15 = arith.constant 0 : index
    %c0_16 = arith.constant 0 : index
    %c0_17 = arith.constant 0 : index
    %68 = vector.load %arg4[%c0_15, %c0_16, %c0_17] : memref<1x4x128xf32, #tpu.memory_space<vmem>>, vector<1x4x128xf32>
    %69 = vector.shape_cast %68 : vector<1x4x128xf32> to vector<4x128xf32>
    %70 = vector.shape_cast %67 : vector<4x128xf32> to vector<1x4x128xf32>
    tpu.vector_store %arg4[%c0_15, %c0_16, %c0_17], %70 {strides = array<i32>} : memref<1x4x128xf32, #tpu.memory_space<vmem>>, vector<1x4x128xf32>,
    return
  }
  func.func @transform_0(%arg0: i32, %arg1: i32) -> (i32, i32, i32) {
    %c0_i32 = arith.constant 0 : i32
    %c0_i32_0 = arith.constant 0 : i32
    return %arg0, %c0_i32, %arg1 : i32, i32, i32
  }
  func.func @transform_1(%arg0: i32, %arg1: i32) -> (i32, i32) {
    %c0_i32 = arith.constant 0 : i32
    %c0_i32_0 = arith.constant 0 : i32
    %c0_i32_1 = arith.constant 0 : i32
    return %c0_i32, %c0_i32_0 : i32, i32
  }
  func.func @transform_2(%arg0: i32, %arg1: i32) -> (i32, i32, i32) {
    %c0_i32 = arith.constant 0 : i32
    %c0_i32_0 = arith.constant 0 : i32
    return %arg0, %c0_i32, %arg1 : i32, i32, i32
  }
}

</mosaic_0001>

<llo_original>
// kernel: tpu_custom_call.1
$region0: #{tpu_custom_call.1}
  #allocation0 [shape = 'u32[]', space=smem, size = 0x4, offset = 0x4, fixed_abs, tag = 'smem constant byte address 0x4 - core index']
  #allocation1 [shape = 'u32[144,128]{1,0:T(1,128)}', space=vmem, size = 0x12000, scoped, tag = 'internal scratch']
  %s0 = inlined_call_operand.vmem [shape: f32[2,2,128], index: 0, kind: input, shape index: {}]
  %s1 = inlined_call_operand.vmem [shape: f32[64,16], index: 1, kind: input, shape index: {}]
  %s2 = inlined_call_operand.hbm [shape: f32[2,4,128], index: 2, kind: output, shape index: {}]
  %s3 = sld [smem:[#allocation0]]
  $region41: #{tpu_custom_call.1} parent=0
    _
  %s5 = ssub.s32 1, %s3
  %s6 = scalar_select 0, %s5, %s3
  $region1: #{tpu_custom_call.1} parent=0
    #allocation2 [shape = 'u8[4096]{0}', space=vmem, size = 0x1000, scoped, tag = 'output window, operand 0']
    #allocation3 [shape = 's32[2]{0}', space=sflag, size = 0x8, scoped, tag = 'scoped memory for tpu_custom_call.1']
    %7 = vsyncpa [#allocation3], 0
    %s8 = scalar_lea.sflag [#allocation3], 1
    %9 = vsyncpa %s8, 0
    loop: start=0, step=1, limit=4
    $region2: #{tpu_custom_call.1} parent=1 // loop_pre_header
      _
    $region3: #{tpu_custom_call.1} parent=1 // loop_header
      %s11 = sphi 0, %s15
      %p12 = scmp.ge.s32.totalorder %s11, 4
      %s18 = sphi 0, %s30
      %s19 = sphi 0, %s26
      %s20 = sphi 0, %s18
      %s21 = sphi 0, %s19
      %s22 = sphi 0, %s20
      %s23 = sphi 0, %s21
      %s35 = sphi 0, %s37
      %s38 = sphi 0, %s35
      %s39 = sphi 0, %s38
      %s55 = sphi 0, %s39
      %s59 = sphi 0, %s59
      %s61 = sphi 0, %s59
      %s62 = sphi 0, %s61
      %s76 = sphi 0, %s62
      %s84 = sphi 0, %s86
      %s87 = sphi 0, %s84
      %s88 = sphi 0, %s87
      %s104 = sphi 0, %s88
    $region4: #{tpu_custom_call.1} parent=1 // loop_header_branch
      %14 = sbr.rel (%p12) target = $region8
    $region5: #{tpu_custom_call.1} parent=1 // loop_body
      %s16 = ssub.s32 %s11, 1
      %s17 = ssub.s32 %s11, 2
      %s24 = sadd.s32 1, %s19
      %p25 = scmp.ge.s32.totalorder %s24, 1
      %s26 = scalar_select %p25, 0, %s24
      %s27 = sadd.s32 1, %s18
      %s28 = scalar_select %p25, %s27, %s18
      %p29 = scmp.ge.s32.totalorder %s28, 2
      %s30 = scalar_select %p29, 0, %s28
      %s31 = ssub.s32 %s18, %s30
      %s32 = ssub.s32 %s19, %s26
      %s33 = sor.u32 %s31, %s32
      %p34 = scmp.eq.s32.totalorder %s33, 0
      %s36 = sadd.s32 %s35, 1
      %s37 = scalar_select %p34, %s35, %s36
      %p40 = pneg %p34
      %p41 = scmp.eq.s32.totalorder %s11, 1
      %p42 = por %p40, %p41
      %p43 = scmp.ne.s32.totalorder %s35, %s38
      %p44 = scmp.eq.s32.totalorder %s11, 0
      %p45 = por %p43, %p44
      %p46 = scmp.ne.s32.totalorder %s35, %s38
      %p47 = scmp.eq.s32.totalorder %s16, 1
      %p48 = por %p46, %p47
      %p49 = scmp.ne.s32.totalorder %s38, %s39
      %p50 = scmp.eq.s32.totalorder %s16, 0
      %p51 = por %p49, %p50
      %p52 = scmp.ne.s32.totalorder %s38, %s39
      %p53 = scmp.eq.s32.totalorder %s17, 1
      %p54 = por %p52, %p53
      %p56 = scmp.ne.s32.totalorder %s39, %s55
      %p57 = scmp.eq.s32.totalorder %s17, 0
      %p58 = por %p56, %p57
      %s60 = sadd.s32 %s59, 1
      %p63 = scmp.eq.s32.totalorder %s11, 1
      %p64 = scmp.ne.s32.totalorder %s59, %s61
      %p65 = scmp.eq.s32.totalorder %s11, 0
      %p66 = por %p64, %p65
      %p67 = scmp.ne.s32.totalorder %s59, %s61
      %p68 = scmp.eq.s32.totalorder %s16, 1
      %p69 = por %p67, %p68
      %p70 = scmp.ne.s32.totalorder %s61, %s62
      %p71 = scmp.eq.s32.totalorder %s16, 0
      %p72 = por %p70, %p71
      %p73 = scmp.ne.s32.totalorder %s61, %s62
      %p74 = scmp.eq.s32.totalorder %s17, 1
      %p75 = por %p73, %p74
      %p77 = scmp.ne.s32.totalorder %s62, %s76
      %p78 = scmp.eq.s32.totalorder %s17, 0
      %p79 = por %p77, %p78
      %s80 = ssub.s32 %s18, %s30
      %s81 = ssub.s32 %s19, %s26
      %s82 = sor.u32 %s80, %s81
      %p83 = scmp.eq.s32.totalorder %s82, 0
      %s85 = sadd.s32 %s84, 1
      %s86 = scalar_select %p83, %s84, %s85
      %p89 = pneg %p83
      %p90 = scmp.eq.s32.totalorder %s11, 1
      %p91 = por %p89, %p90
      %p92 = scmp.ne.s32.totalorder %s84, %s87
      %p93 = scmp.eq.s32.totalorder %s11, 0
      %p94 = por %p92, %p93
      %p95 = scmp.ne.s32.totalorder %s84, %s87
      %p96 = scmp.eq.s32.totalorder %s16, 1
      %p97 = por %p95, %p96
      %p98 = scmp.ne.s32.totalorder %s87, %s88
      %p99 = scmp.eq.s32.totalorder %s16, 0
      %p100 = por %p98, %p99
      %p101 = scmp.ne.s32.totalorder %s87, %s88
      %p102 = scmp.eq.s32.totalorder %s17, 1
      %p103 = por %p101, %p102
      %p105 = scmp.ne.s32.totalorder %s88, %s104
      %p106 = scmp.eq.s32.totalorder %s17, 0
      %p107 = por %p105, %p106
      %p108 = scmp.le.s32.totalorder 1, %s11
      %p109 = scmp.lt.s32.totalorder %s11, 3
      %p110 = pnand %p108, %p109
      %p111 = pneg %p110
      // Predicated region
      $region9: #{tpu_custom_call.1} parent=5 // pred_check
        _
      $region10: #{tpu_custom_call.1} parent=5 // pred_check_branch
        %113 = sbr.rel (%p110) target = $region12
      $region11: #{tpu_custom_call.1} parent=5 // pred_region
        %s114 = ssub.s32 %s11, 1
        // Predicated region
        $region13: #{tpu_custom_call.1} parent=11 // pred_check
          %p115 = pneg %p72
        $region14: #{tpu_custom_call.1} parent=11 // pred_check_branch
          %117 = sbr.rel (%p115) target = $region16
        $region15: #{tpu_custom_call.1} parent=11 // pred_region
          _
        $region16: #{tpu_custom_call.1} parent=11 // pred_fallthru
          _
      $region12: #{tpu_custom_call.1} parent=5 // pred_fallthru
        _
      %p118 = scmp.lt.s32.totalorder %s11, 2
      // Predicated region
      $region17: #{tpu_custom_call.1} parent=5 // pred_check
        %p119 = pneg %p118
      $region18: #{tpu_custom_call.1} parent=5 // pred_check_branch
        %121 = sbr.rel (%p119) target = $region20
      $region19: #{tpu_custom_call.1} parent=5 // pred_region
        // Predicated region
        $region21: #{tpu_custom_call.1} parent=19 // pred_check
          %p122 = pneg %p45
        $region22: #{tpu_custom_call.1} parent=19 // pred_check_branch
          %124 = sbr.rel (%p122) target = $region24
        $region23: #{tpu_custom_call.1} parent=19 // pred_region
          %p125 = scmp.lt.s32.totalorder %s18, 1
          %s126 = scalar_select %p125, %s18, 1
          %p127 = scmp.lt.s32.totalorder %s19, 0
          %s128 = scalar_select %p127, %s19, 0
          %s129 = sadd.s32 %s128, %s126
          %s130 = smul.addr %s129, 2
          %s131 = scalar_lea.vmem %s0, %s130
        $region24: #{tpu_custom_call.1} parent=19 // pred_fallthru
          _
      $region20: #{tpu_custom_call.1} parent=5 // pred_fallthru
        _
      %p132 = scmp.le.s32.totalorder 1, %s11
      %p133 = scmp.lt.s32.totalorder %s11, 3
      %p134 = pnand %p132, %p133
      %p135 = pneg %p134
      // Predicated region
      $region25: #{tpu_custom_call.1} parent=5 // pred_check
        _
      $region26: #{tpu_custom_call.1} parent=5 // pred_check_branch
        %137 = sbr.rel (%p134) target = $region28
      $region27: #{tpu_custom_call.1} parent=5 // pred_region
        %s138 = ssub.s32 %s11, 1
        %p139 = scmp.lt.s32.totalorder %s20, 1
        %s140 = scalar_select %p139, %s20, 1
        %p141 = scmp.lt.s32.totalorder %s21, 0
        %s142 = scalar_select %p141, %s21, 0
        %s143 = sadd.s32 %s142, %s140
        %s144 = smul.addr %s143, 2
        %s145 = scalar_lea.vmem %s0, %s144
        %p146 = pneg %p51
        %p147 = pneg %p48
        %p148 = pneg %p72
        %p149 = pneg %p69
        %p150 = pneg %p100
        %p151 = pneg %p97
        %s152 = sand.u32 %s87, 1
        %s153 = scalar_lea.sflag [#allocation3], %s152
        %s154 = sand.u32 %s87, 1
        %s155 = smul.addr %s154, 4
        %s156 = scalar_lea.vmem [#allocation2], %s155
        %p157 = scmp.lt.s32.totalorder %s20, 1
        %s158 = scalar_select %p157, %s20, 1
        %p159 = scmp.lt.s32.totalorder %s21, 0
        %s160 = scalar_select %p159, %s21, 0
        %s161 = sadd.s32 %s160, %s158
        %s162 = smul.addr %s161, 2
        %s163 = scalar_lea.vmem %s0, %s162
        %v164 = vld [vmem:[%s163] sm:$0x3]
        %v165 = vadd.f32 %v164, 1.0
        %v166 = vmul.f32 %v165, 0.5
        %v167 = vmul.f32 %v166, 15.0
        %v168 = vmax.f32 %v167, 0.0
        %v169 = vmin.f32 %v168, 15.0
        %v170 = vfloor.f32 %v169
        %v171 = vsub.f32 %v169, %v170
        %v172 = vcvt.f32.s32.to.zero.pseudo %v170
        %v173 = vadd.s32 %v172, 1
        %vm174 = vcmp.lt.s32.totalorder %v173, 15
        %v175 = vsel %vm174, %v173, 15
        %v176 = vlaneseq
        %v177 = vshrl.u32 %v176, 7
        %v178 = vadd.s32 %v177, 8
        %v179 = vlaneseq
        %v180 = vshrl.u32 %v179, 7
        %v181 = vsub.s32 0, %v180
        %v182 = vrot.slane %v172, %v181
        %vm183 = vcmp.eq.s32.totalorder %v177, %v182
        %vm184 = vcmp.eq.s32.totalorder %v178, %v182
        %v185 = vsub.f32 1.0, %v171
        %v186 = vlaneseq
        %v187 = vshrl.u32 %v186, 7
        %v188 = vsub.s32 0, %v187
        %v189 = vrot.slane %v185, %v188
        %v190 = vsel %vm183, %v189, 0.0
        %v191 = vsel %vm184, %v189, 0.0
        %v192 = vlaneseq
        %v193 = vshrl.u32 %v192, 7
        %v194 = vsub.s32 0, %v193
        %v195 = vrot.slane %v175, %v194
        %vm196 = vcmp.eq.s32.totalorder %v177, %v195
        %vm197 = vcmp.eq.s32.totalorder %v178, %v195
        %v198 = vlaneseq
        %v199 = vshrl.u32 %v198, 7
        %v200 = vsub.s32 0, %v199
        %v201 = vrot.slane %v171, %v200
        %v202 = vsel %vm196, %v201, 0.0
        %v203 = vsel %vm197, %v201, 0.0
        %v204 = vadd.f32 %v190, %v202
        %v205 = vadd.f32 %v191, %v203
        %v206 = vlaneseq
        %v207 = vshrl.u32 %v206, 7
        %v208 = vsub.s32 1, %v207
        %v209 = vrot.slane %v172, %v208
        %vm210 = vcmp.eq.s32.totalorder %v177, %v209
        %vm211 = vcmp.eq.s32.totalorder %v178, %v209
        %v212 = vlaneseq
        %v213 = vshrl.u32 %v212, 7
        %v214 = vsub.s32 1, %v213
        %v215 = vrot.slane %v185, %v214
        %v216 = vsel %vm210, %v215, 0.0
        %v217 = vsel %vm211, %v215, 0.0
        %v218 = vlaneseq
        %v219 = vshrl.u32 %v218, 7
        %v220 = vsub.s32 1, %v219
        %v221 = vrot.slane %v175, %v220
        %vm222 = vcmp.eq.s32.totalorder %v177, %v221
        %vm223 = vcmp.eq.s32.totalorder %v178, %v221
        %v224 = vlaneseq
        %v225 = vshrl.u32 %v224, 7
        %v226 = vsub.s32 1, %v225
        %v227 = vrot.slane %v171, %v226
        %v228 = vsel %vm222, %v227, 0.0
        %v229 = vsel %vm223, %v227, 0.0
        %v230 = vadd.f32 %v216, %v228
        %v231 = vadd.f32 %v217, %v229
        %v232 = vld [vmem:[%s1] sm:$0xff]
        %v233 = vld [vmem:[%s1 + $0x8] sm:$0xff]
        %v234 = vld [vmem:[%s1 + $0x10] sm:$0xff]
        %v235 = vld [vmem:[%s1 + $0x18] sm:$0xff]
        %v236 = vld [vmem:[%s1 + $0x20] sm:$0xff]
        %v237 = vld [vmem:[%s1 + $0x28] sm:$0xff]
        %v238 = vld [vmem:[%s1 + $0x30] sm:$0xff]
        %v239 = vld [vmem:[%s1 + $0x38] sm:$0xff]
        %vm240 = vcmask 130048
        %v242 = vsel %vm240, %v232, 0
        %v245 = vsel %vm240, %v233, 0
        %v248 = vsel %vm240, %v234, 0
        %v251 = vsel %vm240, %v235, 0
        %v254 = vsel %vm240, %v236, 0
        %v257 = vsel %vm240, %v237, 0
        %v260 = vsel %vm240, %v238, 0
        %v263 = vsel %vm240, %v239, 0
        %265 = vmatprep.subr.mxu0 0.0
        %266 = vmatpush1.msra.mxu0 0.0
        %267 = vmatprep.subr.mxu0 0.0
        %268 = vmatpush1.msra.mxu0 0.0
        %269 = vmatprep.subr.mxu0 0.0
        %270 = vmatpush1.msra.mxu0 0.0
        %271 = vmatprep.subr.mxu0 0.0
        %272 = vmatpush1.msra.mxu0 0.0
        %273 = vmatprep.subr.mxu0 0.0
        %274 = vmatpush1.msra.mxu0 0.0
        %275 = vmatprep.subr.mxu0 0.0
        %276 = vmatpush1.msra.mxu0 0.0
        %277 = vmatprep.subr.mxu0 0.0
        %278 = vmatpush1.msra.mxu0 0.0
        %279 = vmatprep.subr.mxu0 0.0
        %280 = vmatpush1.msra.mxu0 0.0
        %281 = vmatprep.subr.mxu0 0.0
        %282 = vmatpush1.msra.mxu0 0.0
        %283 = vmatprep.subr.mxu0 0.0
        %284 = vmatpush1.msra.mxu0 0.0
        %285 = vmatprep.subr.mxu0 0.0
        %286 = vmatpush1.msra.mxu0 0.0
        %287 = vmatprep.subr.mxu0 0.0
        %288 = vmatpush1.msra.mxu0 0.0
        %289 = vmatprep.subr.mxu0 0.0
        %290 = vmatpush1.msra.mxu0 0.0
        %291 = vmatprep.subr.mxu0 0.0
        %292 = vmatpush1.msra.mxu0 0.0
        %293 = vmatprep.subr.mxu0 0.0
        %294 = vmatpush1.msra.mxu0 %v205
        %295 = vmatprep.subr.mxu0 0.0
        %296 = vmatpush1.msra.mxu0 %v204
        %297 = vmatprep.subr.mxu0 0.0
        %298 = vmatpush2.msra.mxu0 0.0
        %299 = vmatprep.subr.mxu0 0.0
        %300 = vmatpush2.msra.mxu0 0.0
        %301 = vmatprep.subr.mxu0 0.0
        %302 = vmatpush2.msra.mxu0 0.0
        %303 = vmatprep.subr.mxu0 0.0
        %304 = vmatpush2.msra.mxu0 0.0
        %305 = vmatprep.subr.mxu0 0.0
        %306 = vmatpush2.msra.mxu0 0.0
        %307 = vmatprep.subr.mxu0 0.0
        %308 = vmatpush2.msra.mxu0 0.0
        %309 = vmatprep.subr.mxu0 0.0
        %310 = vmatpush2.msra.mxu0 0.0
        %311 = vmatprep.subr.mxu0 0.0
        %312 = vmatpush2.msra.mxu0 0.0
        %313 = vmatprep.subr.mxu0 0.0
        %314 = vmatpush2.msra.mxu0 0.0
        %315 = vmatprep.subr.mxu0 0.0
        %316 = vmatpush2.msra.mxu0 0.0
        %317 = vmatprep.subr.mxu0 0.0
        %318 = vmatpush2.msra.mxu0 0.0
        %319 = vmatprep.subr.mxu0 0.0
        %320 = vmatpush2.msra.mxu0 0.0
        %321 = vmatprep.subr.mxu0 0.0
        %322 = vmatpush2.msra.mxu0 0.0
        %323 = vmatprep.subr.mxu0 0.0
        %324 = vmatpush2.msra.mxu0 0.0
        %325 = vmatprep.subr.mxu0 0.0
        %326 = vmatpush2.msra.mxu0 0.0
        %327 = vmatprep.subr.mxu0 0.0
        %328 = vmatpush2.msra.mxu0 0.0
        %329 = vmatprep.mubr.f32.mxu0 0.0
        %330 = vmatmul.mubr.f32.gmra.mxu0 %v242
        %v331 = vpop.f32.mrf.mxu0
        %v332 = vadd.f32 0.0, %v331
        %v333 = vpop.f32.mrf.mxu0
        %334 = vmatprep.mubr.f32.mxu0 0.0
        %335 = vmatmul.mubr.f32.gmra.mxu0 %v245
        %v336 = vpop.f32.mrf.mxu0
        %v337 = vadd.f32 0.0, %v336
        %v338 = vpop.f32.mrf.mxu0
        %339 = vmatprep.mubr.f32.mxu0 0.0
        %340 = vmatmul.mubr.f32.gmra.mxu0 %v248
        %v341 = vpop.f32.mrf.mxu0
        %v342 = vadd.f32 0.0, %v341
        %v343 = vpop.f32.mrf.mxu0
        %344 = vmatprep.mubr.f32.mxu0 0.0
        %345 = vmatmul.mubr.f32.gmra.mxu0 %v251
        %v346 = vpop.f32.mrf.mxu0
        %v347 = vadd.f32 0.0, %v346
        %v348 = vpop.f32.mrf.mxu0
        %349 = vmatprep.mubr.f32.mxu0 0.0
        %350 = vmatmul.mubr.f32.gmra.mxu0 %v254
        %v351 = vpop.f32.mrf.mxu0
        %v352 = vadd.f32 0.0, %v351
        %v353 = vpop.f32.mrf.mxu0
        %354 = vmatprep.mubr.f32.mxu0 0.0
        %355 = vmatmul.mubr.f32.gmra.mxu0 %v257
        %v356 = vpop.f32.mrf.mxu0
        %v357 = vadd.f32 0.0, %v356
        %v358 = vpop.f32.mrf.mxu0
        %359 = vmatprep.mubr.f32.mxu0 0.0
        %360 = vmatmul.mubr.f32.gmra.mxu0 %v260
        %v361 = vpop.f32.mrf.mxu0
        %v362 = vadd.f32 0.0, %v361
        %v363 = vpop.f32.mrf.mxu0
        %364 = vmatprep.mubr.f32.mxu0 0.0
        %365 = vmatmul.mubr.f32.gmra.mxu0 %v263
        %v366 = vpop.f32.mrf.mxu0
        %v367 = vadd.f32 0.0, %v366
        %v368 = vpop.f32.mrf.mxu0
        %369 = vdwg.mxu0
        %v370 = vmul.f32 %v332, %v230
        %v371 = vmul.f32 %v337, %v231
        %v372 = vmul.f32 %v342, %v230
        %v373 = vmul.f32 %v347, %v231
        %v374 = vmul.f32 %v352, %v230
        %v375 = vmul.f32 %v357, %v231
        %v376 = vmul.f32 %v362, %v230
        %v377 = vmul.f32 %v367, %v231
        %v378 = vadd.f32 %v370, %v371
        %v379 = vrot.slane %v378, 4
        %v380 = vadd.f32 %v378, %v379
        %v381 = vrot.slane %v380, 2
        %v382 = vadd.f32 %v380, %v381
        %v383 = vrot.slane %v382, 1
        %v384 = vadd.f32 %v382, %v383
        %v385 = vadd.f32 %v372, %v373
        %v386 = vrot.slane %v385, 4
        %v387 = vadd.f32 %v385, %v386
        %v388 = vrot.slane %v387, 2
        %v389 = vadd.f32 %v387, %v388
        %v390 = vrot.slane %v389, 1
        %v391 = vadd.f32 %v389, %v390
        %v392 = vadd.f32 %v374, %v375
        %v393 = vrot.slane %v392, 4
        %v394 = vadd.f32 %v392, %v393
        %v395 = vrot.slane %v394, 2
        %v396 = vadd.f32 %v394, %v395
        %v397 = vrot.slane %v396, 1
        %v398 = vadd.f32 %v396, %v397
        %v399 = vadd.f32 %v376, %v377
        %v400 = vrot.slane %v399, 4
        %v401 = vadd.f32 %v399, %v400
        %v402 = vrot.slane %v401, 2
        %v403 = vadd.f32 %v401, %v402
        %v404 = vrot.slane %v403, 1
        %v405 = vadd.f32 %v403, %v404
        %vm410 = vcmask 1041409
        %v411 = vsel %vm410, %v391, %v384
        %vm412 = vcmask 1042434
        %v413 = vsel %vm412, %v398, %v411
        %vm414 = vcmask 1043459
        %v415 = vsel %vm414, %v405, %v413
        %417 = vst [vmem:[%s156] sm:$0xf] %v415
        %s418 = sand.u32 %s87, 1
        %s419 = scalar_lea.sflag [#allocation3], %s418
        %s420 = sand.u32 %s87, 1
        %s421 = smul.addr %s420, 4
        %s422 = scalar_lea.vmem [#allocation2], %s421
        // Predicated region
        $region29: #{tpu_custom_call.1} parent=27 // pred_check
          %p423 = pneg %p97
        $region30: #{tpu_custom_call.1} parent=27 // pred_check_branch
          %425 = sbr.rel (%p423) target = $region32
        $region31: #{tpu_custom_call.1} parent=27 // pred_region
          %s427 = ssub.s32 64, 64
          %428 = vsyncadd %s419, %s427
          %s429 = sadd.s32 %s21, %s20
          %s430 = smul.addr %s429, 64
          %s431 = scalar_lea.hbm %s2, %s430
          %s433 = sshll.u32 %s422, 4
          %s434 = int_to_ptr.vmem [resolvable:$true] %s433
          %436 = dma.vmem_to_hbm [thread:$0]  %s434, 64, %s431, %s419
        $region32: #{tpu_custom_call.1} parent=27 // pred_fallthru
          _
      $region28: #{tpu_custom_call.1} parent=5 // pred_fallthru
        _
      %p437 = scmp.le.s32.totalorder 2, %s11
      // Predicated region
      $region33: #{tpu_custom_call.1} parent=5 // pred_check
        %p438 = pneg %p437
      $region34: #{tpu_custom_call.1} parent=5 // pred_check_branch
        %440 = sbr.rel (%p438) target = $region36
      $region35: #{tpu_custom_call.1} parent=5 // pred_region
        %s441 = ssub.s32 %s11, 2
        // Predicated region
        $region37: #{tpu_custom_call.1} parent=35 // pred_check
          %p442 = pneg %p103
        $region38: #{tpu_custom_call.1} parent=35 // pred_check_branch
          %444 = sbr.rel (%p442) target = $region40
        $region39: #{tpu_custom_call.1} parent=35 // pred_region
          %s445 = sand.u32 %s88, 1
          %s446 = scalar_lea.sflag [#allocation3], %s445
          %s447 = sand.u32 %s88, 1
          %s448 = smul.addr %s447, 4
          %s449 = scalar_lea.vmem [#allocation2], %s448
          %450 = dma.done %s446, 64
        $region40: #{tpu_custom_call.1} parent=35 // pred_fallthru
          _
      $region36: #{tpu_custom_call.1} parent=5 // pred_fallthru
        _
    $region6: #{tpu_custom_call.1} parent=1 // loop_footer
      %s15 = sadd.s32 1, %s11
    $region7: #{tpu_custom_call.1} parent=1 // loop_footer_branch
      %10 = sbr.rel target = $region3
    $region8: #{tpu_custom_call.1} parent=1 // loop_exit
      _
    %451 = vsyncpa [#allocation3], 1
    %s452 = scalar_lea.sflag [#allocation3], 1
    %453 = vsyncpa %s452, 1

// kernel: tpu_custom_call.1
$region0: #{tpu_custom_call.1}
  #allocation0 [shape = 'u32[]', space=smem, size = 0x4, offset = 0x4, fixed_abs, tag = 'smem constant byte address 0x4 - core index']
  #allocation1 [shape = 'u32[144,128]{1,0:T(1,128)}', space=vmem, size = 0x12000, scoped, tag = 'internal scratch']
  %s0 = inlined_call_operand.vmem [shape: f32[2,2,128], index: 0, kind: input, shape index: {}]
  %s1 = inlined_call_operand.vmem [shape: f32[64,16], index: 1, kind: input, shape index: {}]
  %s2 = inlined_call_operand.hbm [shape: f32[2,4,128], index: 2, kind: output, shape index: {}]
  %s3 = sld [smem:[#allocation0]]
  $region41: #{tpu_custom_call.1} parent=0
    _
  %s5 = ssub.s32 1, %s3
  %s6 = scalar_select 0, %s5, %s3
  $region1: #{tpu_custom_call.1} parent=0
    #allocation2 [shape = 'u8[4096]{0}', space=vmem, size = 0x1000, scoped, tag = 'output window, operand 0']
    #allocation3 [shape = 's32[2]{0}', space=sflag, size = 0x8, scoped, tag = 'scoped memory for tpu_custom_call.1']
    %7 = vsyncpa [#allocation3], 0
    %s8 = scalar_lea.sflag [#allocation3], 1
    %9 = vsyncpa %s8, 0
    loop: start=0, step=1, limit=4
    $region2: #{tpu_custom_call.1} parent=1 // loop_pre_header
      _
    $region3: #{tpu_custom_call.1} parent=1 // loop_header
      %s11 = sphi 0, %s15
      %p12 = scmp.ge.s32.totalorder %s11, 4
      %s18 = sphi 0, %s30
      %s19 = sphi 0, %s26
      %s20 = sphi 0, %s18
      %s21 = sphi 0, %s19
      %s22 = sphi 0, %s20
      %s23 = sphi 0, %s21
      %s35 = sphi 0, %s37
      %s38 = sphi 0, %s35
      %s39 = sphi 0, %s38
      %s55 = sphi 0, %s39
      %s59 = sphi 0, %s59
      %s61 = sphi 0, %s59
      %s62 = sphi 0, %s61
      %s76 = sphi 0, %s62
      %s84 = sphi 0, %s86
      %s87 = sphi 0, %s84
      %s88 = sphi 0, %s87
      %s104 = sphi 0, %s88
    $region4: #{tpu_custom_call.1} parent=1 // loop_header_branch
      %14 = sbr.rel (%p12) target = $region8
    $region5: #{tpu_custom_call.1} parent=1 // loop_body
      %s16 = ssub.s32 %s11, 1
      %s17 = ssub.s32 %s11, 2
      %s24 = sadd.s32 1, %s19
      %p25 = scmp.ge.s32.totalorder %s24, 1
      %s26 = scalar_select %p25, 0, %s24
      %s27 = sadd.s32 1, %s18
      %s28 = scalar_select %p25, %s27, %s18
      %p29 = scmp.ge.s32.totalorder %s28, 2
      %s30 = scalar_select %p29, 0, %s28
      %s31 = ssub.s32 %s18, %s30
      %s32 = ssub.s32 %s19, %s26
      %s33 = sor.u32 %s31, %s32
      %p34 = scmp.eq.s32.totalorder %s33, 0
      %s36 = sadd.s32 %s35, 1
      %s37 = scalar_select %p34, %s35, %s36
      %p40 = pneg %p34
      %p41 = scmp.eq.s32.totalorder %s11, 1
      %p42 = por %p40, %p41
      %p43 = scmp.ne.s32.totalorder %s35, %s38
      %p44 = scmp.eq.s32.totalorder %s11, 0
      %p45 = por %p43, %p44
      %p46 = scmp.ne.s32.totalorder %s35, %s38
      %p47 = scmp.eq.s32.totalorder %s16, 1
      %p48 = por %p46, %p47
      %p49 = scmp.ne.s32.totalorder %s38, %s39
      %p50 = scmp.eq.s32.totalorder %s16, 0
      %p51 = por %p49, %p50
      %p52 = scmp.ne.s32.totalorder %s38, %s39
      %p53 = scmp.eq.s32.totalorder %s17, 1
      %p54 = por %p52, %p53
      %p56 = scmp.ne.s32.totalorder %s39, %s55
      %p57 = scmp.eq.s32.totalorder %s17, 0
      %p58 = por %p56, %p57
      %s60 = sadd.s32 %s59, 1
      %p63 = scmp.eq.s32.totalorder %s11, 1
      %p64 = scmp.ne.s32.totalorder %s59, %s61
      %p65 = scmp.eq.s32.totalorder %s11, 0
      %p66 = por %p64, %p65
      %p67 = scmp.ne.s32.totalorder %s59, %s61
      %p68 = scmp.eq.s32.totalorder %s16, 1
      %p69 = por %p67, %p68
      %p70 = scmp.ne.s32.totalorder %s61, %s62
      %p71 = scmp.eq.s32.totalorder %s16, 0
      %p72 = por %p70, %p71
      %p73 = scmp.ne.s32.totalorder %s61, %s62
      %p74 = scmp.eq.s32.totalorder %s17, 1
      %p75 = por %p73, %p74
      %p77 = scmp.ne.s32.totalorder %s62, %s76
      %p78 = scmp.eq.s32.totalorder %s17, 0
      %p79 = por %p77, %p78
      %s80 = ssub.s32 %s18, %s30
      %s81 = ssub.s32 %s19, %s26
      %s82 = sor.u32 %s80, %s81
      %p83 = scmp.eq.s32.totalorder %s82, 0
      %s85 = sadd.s32 %s84, 1
      %s86 = scalar_select %p83, %s84, %s85
      %p89 = pneg %p83
      %p90 = scmp.eq.s32.totalorder %s11, 1
      %p91 = por %p89, %p90
      %p92 = scmp.ne.s32.totalorder %s84, %s87
      %p93 = scmp.eq.s32.totalorder %s11, 0
      %p94 = por %p92, %p93
      %p95 = scmp.ne.s32.totalorder %s84, %s87
      %p96 = scmp.eq.s32.totalorder %s16, 1
      %p97 = por %p95, %p96
      %p98 = scmp.ne.s32.totalorder %s87, %s88
      %p99 = scmp.eq.s32.totalorder %s16, 0
      %p100 = por %p98, %p99
      %p101 = scmp.ne.s32.totalorder %s87, %s88
      %p102 = scmp.eq.s32.totalorder %s17, 1
      %p103 = por %p101, %p102
      %p105 = scmp.ne.s32.totalorder %s88, %s104
      %p106 = scmp.eq.s32.totalorder %s17, 0
      %p107 = por %p105, %p106
      %p108 = scmp.le.s32.totalorder 1, %s11
      %p109 = scmp.lt.s32.totalorder %s11, 3
      %p110 = pnand %p108, %p109
      %p111 = pneg %p110
      // Predicated region
      $region9: #{tpu_custom_call.1} parent=5 // pred_check
        _
      $region10: #{tpu_custom_call.1} parent=5 // pred_check_branch
        %113 = sbr.rel (%p110) target = $region12
      $region11: #{tpu_custom_call.1} parent=5 // pred_region
        %s114 = ssub.s32 %s11, 1
        // Predicated region
        $region13: #{tpu_custom_call.1} parent=11 // pred_check
          %p115 = pneg %p72
        $region14: #{tpu_custom_call.1} parent=11 // pred_check_branch
          %117 = sbr.rel (%p115) target = $region16
        $region15: #{tpu_custom_call.1} parent=11 // pred_region
          _
        $region16: #{tpu_custom_call.1} parent=11 // pred_fallthru
          _
      $region12: #{tpu_custom_call.1} parent=5 // pred_fallthru
        _
      %p118 = scmp.lt.s32.totalorder %s11, 2
      // Predicated region
      $region17: #{tpu_custom_call.1} parent=5 // pred_check
        %p119 = pneg %p118
      $region18: #{tpu_custom_call.1} parent=5 // pred_check_branch
        %121 = sbr.rel (%p119) target = $region20
      $region19: #{tpu_custom_call.1} parent=5 // pred_region
        // Predicated region
        $region21: #{tpu_custom_call.1} parent=19 // pred_check
          %p122 = pneg %p45
        $region22: #{tpu_custom_call.1} parent=19 // pred_check_branch
          %124 = sbr.rel (%p122) target = $region24
        $region23: #{tpu_custom_call.1} parent=19 // pred_region
          %p125 = scmp.lt.s32.totalorder %s18, 1
          %s126 = scalar_select %p125, %s18, 1
          %p127 = scmp.lt.s32.totalorder %s19, 0
          %s128 = scalar_select %p127, %s19, 0
          %s129 = sadd.s32 %s128, %s126
          %s130 = smul.addr %s129, 2
          %s131 = scalar_lea.vmem %s0, %s130
        $region24: #{tpu_custom_call.1} parent=19 // pred_fallthru
          _
      $region20: #{tpu_custom_call.1} parent=5 // pred_fallthru
        _
      %p132 = scmp.le.s32.totalorder 1, %s11
      %p133 = scmp.lt.s32.totalorder %s11, 3
      %p134 = pnand %p132, %p133
      %p135 = pneg %p134
      // Predicated region
      $region25: #{tpu_custom_call.1} parent=5 // pred_check
        _
      $region26: #{tpu_custom_call.1} parent=5 // pred_check_branch
        %137 = sbr.rel (%p134) target = $region28
      $region27: #{tpu_custom_call.1} parent=5 // pred_region
        %s138 = ssub.s32 %s11, 1
        %p139 = scmp.lt.s32.totalorder %s20, 1
        %s140 = scalar_select %p139, %s20, 1
        %p141 = scmp.lt.s32.totalorder %s21, 0
        %s142 = scalar_select %p141, %s21, 0
        %s143 = sadd.s32 %s142, %s140
        %s144 = smul.addr %s143, 2
        %s145 = scalar_lea.vmem %s0, %s144
        %p146 = pneg %p51
        %p147 = pneg %p48
        %p148 = pneg %p72
        %p149 = pneg %p69
        %p150 = pneg %p100
        %p151 = pneg %p97
        %s152 = sand.u32 %s87, 1
        %s153 = scalar_lea.sflag [#allocation3], %s152
        %s154 = sand.u32 %s87, 1
        %s155 = smul.addr %s154, 4
        %s156 = scalar_lea.vmem [#allocation2], %s155
        %p157 = scmp.lt.s32.totalorder %s20, 1
        %s158 = scalar_select %p157, %s20, 1
        %p159 = scmp.lt.s32.totalorder %s21, 0
        %s160 = scalar_select %p159, %s21, 0
        %s161 = sadd.s32 %s160, %s158
        %s162 = smul.addr %s161, 2
        %s163 = scalar_lea.vmem %s0, %s162
        %v164 = vld [vmem:[%s163] sm:$0x3]
        %v165 = vadd.f32 %v164, 1.0
        %v166 = vmul.f32 %v165, 0.5
        %v167 = vmul.f32 %v166, 15.0
        %v168 = vmax.f32 %v167, 0.0
        %v169 = vmin.f32 %v168, 15.0
        %v170 = vfloor.f32 %v169
        %v171 = vsub.f32 %v169, %v170
        %v172 = vcvt.f32.s32.to.zero.pseudo %v170
        %v173 = vadd.s32 %v172, 1
        %vm174 = vcmp.lt.s32.totalorder %v173, 15
        %v175 = vsel %vm174, %v173, 15
        %v176 = vlaneseq
        %v177 = vshrl.u32 %v176, 7
        %v178 = vadd.s32 %v177, 8
        %v179 = vlaneseq
        %v180 = vshrl.u32 %v179, 7
        %v181 = vsub.s32 0, %v180
        %v182 = vrot.slane %v172, %v181
        %vm183 = vcmp.eq.s32.totalorder %v177, %v182
        %vm184 = vcmp.eq.s32.totalorder %v178, %v182
        %v185 = vsub.f32 1.0, %v171
        %v186 = vlaneseq
        %v187 = vshrl.u32 %v186, 7
        %v188 = vsub.s32 0, %v187
        %v189 = vrot.slane %v185, %v188
        %v190 = vsel %vm183, %v189, 0.0
        %v191 = vsel %vm184, %v189, 0.0
        %v192 = vlaneseq
        %v193 = vshrl.u32 %v192, 7
        %v194 = vsub.s32 0, %v193
        %v195 = vrot.slane %v175, %v194
        %vm196 = vcmp.eq.s32.totalorder %v177, %v195
        %vm197 = vcmp.eq.s32.totalorder %v178, %v195
        %v198 = vlaneseq
        %v199 = vshrl.u32 %v198, 7
        %v200 = vsub.s32 0, %v199
        %v201 = vrot.slane %v171, %v200
        %v202 = vsel %vm196, %v201, 0.0
        %v203 = vsel %vm197, %v201, 0.0
        %v204 = vadd.f32 %v190, %v202
        %v205 = vadd.f32 %v191, %v203
        %v206 = vlaneseq
        %v207 = vshrl.u32 %v206, 7
        %v208 = vsub.s32 1, %v207
        %v209 = vrot.slane %v172, %v208
        %vm210 = vcmp.eq.s32.totalorder %v177, %v209
        %vm211 = vcmp.eq.s32.totalorder %v178, %v209
        %v212 = vlaneseq
        %v213 = vshrl.u32 %v212, 7
        %v214 = vsub.s32 1, %v213
        %v215 = vrot.slane %v185, %v214
        %v216 = vsel %vm210, %v215, 0.0
        %v217 = vsel %vm211, %v215, 0.0
        %v218 = vlaneseq
        %v219 = vshrl.u32 %v218, 7
        %v220 = vsub.s32 1, %v219
        %v221 = vrot.slane %v175, %v220
        %vm222 = vcmp.eq.s32.totalorder %v177, %v221
        %vm223 = vcmp.eq.s32.totalorder %v178, %v221
        %v224 = vlaneseq
        %v225 = vshrl.u32 %v224, 7
        %v226 = vsub.s32 1, %v225
        %v227 = vrot.slane %v171, %v226
        %v228 = vsel %vm222, %v227, 0.0
        %v229 = vsel %vm223, %v227, 0.0
        %v230 = vadd.f32 %v216, %v228
        %v231 = vadd.f32 %v217, %v229
        %v232 = vld [vmem:[%s1] sm:$0xff]
        %v233 = vld [vmem:[%s1 + $0x8] sm:$0xff]
        %v234 = vld [vmem:[%s1 + $0x10] sm:$0xff]
        %v235 = vld [vmem:[%s1 + $0x18] sm:$0xff]
        %v236 = vld [vmem:[%s1 + $0x20] sm:$0xff]
        %v237 = vld [vmem:[%s1 + $0x28] sm:$0xff]
        %v238 = vld [vmem:[%s1 + $0x30] sm:$0xff]
        %v239 = vld [vmem:[%s1 + $0x38] sm:$0xff]
        %vm240 = vcmask 130048
        %v242 = vsel %vm240, %v232, 0
        %v245 = vsel %vm240, %v233, 0
        %v248 = vsel %vm240, %v234, 0
        %v251 = vsel %vm240, %v235, 0
        %v254 = vsel %vm240, %v236, 0
        %v257 = vsel %vm240, %v237, 0
        %v260 = vsel %vm240, %v238, 0
        %v263 = vsel %vm240, %v239, 0
        %265 = vmatprep.subr.mxu0 0.0
        %266 = vmatpush1.msra.mxu0 0.0
        %267 = vmatprep.subr.mxu0 0.0
        %268 = vmatpush1.msra.mxu0 0.0
        %269 = vmatprep.subr.mxu0 0.0
        %270 = vmatpush1.msra.mxu0 0.0
        %271 = vmatprep.subr.mxu0 0.0
        %272 = vmatpush1.msra.mxu0 0.0
        %273 = vmatprep.subr.mxu0 0.0
        %274 = vmatpush1.msra.mxu0 0.0
        %275 = vmatprep.subr.mxu0 0.0
        %276 = vmatpush1.msra.mxu0 0.0
        %277 = vmatprep.subr.mxu0 0.0
        %278 = vmatpush1.msra.mxu0 0.0
        %279 = vmatprep.subr.mxu0 0.0
        %280 = vmatpush1.msra.mxu0 0.0
        %281 = vmatprep.subr.mxu0 0.0
        %282 = vmatpush1.msra.mxu0 0.0
        %283 = vmatprep.subr.mxu0 0.0
        %284 = vmatpush1.msra.mxu0 0.0
        %285 = vmatprep.subr.mxu0 0.0
        %286 = vmatpush1.msra.mxu0 0.0
        %287 = vmatprep.subr.mxu0 0.0
        %288 = vmatpush1.msra.mxu0 0.0
        %289 = vmatprep.subr.mxu0 0.0
        %290 = vmatpush1.msra.mxu0 0.0
        %291 = vmatprep.subr.mxu0 0.0
        %292 = vmatpush1.msra.mxu0 0.0
        %293 = vmatprep.subr.mxu0 0.0
        %294 = vmatpush1.msra.mxu0 %v205
        %295 = vmatprep.subr.mxu0 0.0
        %296 = vmatpush1.msra.mxu0 %v204
        %297 = vmatprep.subr.mxu0 0.0
        %298 = vmatpush2.msra.mxu0 0.0
        %299 = vmatprep.subr.mxu0 0.0
        %300 = vmatpush2.msra.mxu0 0.0
        %301 = vmatprep.subr.mxu0 0.0
        %302 = vmatpush2.msra.mxu0 0.0
        %303 = vmatprep.subr.mxu0 0.0
        %304 = vmatpush2.msra.mxu0 0.0
        %305 = vmatprep.subr.mxu0 0.0
        %306 = vmatpush2.msra.mxu0 0.0
        %307 = vmatprep.subr.mxu0 0.0
        %308 = vmatpush2.msra.mxu0 0.0
        %309 = vmatprep.subr.mxu0 0.0
        %310 = vmatpush2.msra.mxu0 0.0
        %311 = vmatprep.subr.mxu0 0.0
        %312 = vmatpush2.msra.mxu0 0.0
        %313 = vmatprep.subr.mxu0 0.0
        %314 = vmatpush2.msra.mxu0 0.0
        %315 = vmatprep.subr.mxu0 0.0
        %316 = vmatpush2.msra.mxu0 0.0
        %317 = vmatprep.subr.mxu0 0.0
        %318 = vmatpush2.msra.mxu0 0.0
        %319 = vmatprep.subr.mxu0 0.0
        %320 = vmatpush2.msra.mxu0 0.0
        %321 = vmatprep.subr.mxu0 0.0
        %322 = vmatpush2.msra.mxu0 0.0
        %323 = vmatprep.subr.mxu0 0.0
        %324 = vmatpush2.msra.mxu0 0.0
        %325 = vmatprep.subr.mxu0 0.0
        %326 = vmatpush2.msra.mxu0 0.0
        %327 = vmatprep.subr.mxu0 0.0
        %328 = vmatpush2.msra.mxu0 0.0
        %329 = vmatprep.mubr.f32.mxu0 0.0
        %330 = vmatmul.mubr.f32.gmra.mxu0 %v242
        %v331 = vpop.f32.mrf.mxu0
        %v332 = vadd.f32 0.0, %v331
        %v333 = vpop.f32.mrf.mxu0
        %334 = vmatprep.mubr.f32.mxu0 0.0
        %335 = vmatmul.mubr.f32.gmra.mxu0 %v245
        %v336 = vpop.f32.mrf.mxu0
        %v337 = vadd.f32 0.0, %v336
        %v338 = vpop.f32.mrf.mxu0
        %339 = vmatprep.mubr.f32.mxu0 0.0
        %340 = vmatmul.mubr.f32.gmra.mxu0 %v248
        %v341 = vpop.f32.mrf.mxu0
        %v342 = vadd.f32 0.0, %v341
        %v343 = vpop.f32.mrf.mxu0
        %344 = vmatprep.mubr.f32.mxu0 0.0
        %345 = vmatmul.mubr.f32.gmra.mxu0 %v251
        %v346 = vpop.f32.mrf.mxu0
        %v347 = vadd.f32 0.0, %v346
        %v348 = vpop.f32.mrf.mxu0
        %349 = vmatprep.mubr.f32.mxu0 0.0
        %350 = vmatmul.mubr.f32.gmra.mxu0 %v254
        %v351 = vpop.f32.mrf.mxu0
        %v352 = vadd.f32 0.0, %v351
        %v353 = vpop.f32.mrf.mxu0
        %354 = vmatprep.mubr.f32.mxu0 0.0
        %355 = vmatmul.mubr.f32.gmra.mxu0 %v257
        %v356 = vpop.f32.mrf.mxu0
        %v357 = vadd.f32 0.0, %v356
        %v358 = vpop.f32.mrf.mxu0
        %359 = vmatprep.mubr.f32.mxu0 0.0
        %360 = vmatmul.mubr.f32.gmra.mxu0 %v260
        %v361 = vpop.f32.mrf.mxu0
        %v362 = vadd.f32 0.0, %v361
        %v363 = vpop.f32.mrf.mxu0
        %364 = vmatprep.mubr.f32.mxu0 0.0
        %365 = vmatmul.mubr.f32.gmra.mxu0 %v263
        %v366 = vpop.f32.mrf.mxu0
        %v367 = vadd.f32 0.0, %v366
        %v368 = vpop.f32.mrf.mxu0
        %369 = vdwg.mxu0
        %v370 = vmul.f32 %v332, %v230
        %v371 = vmul.f32 %v337, %v231
        %v372 = vmul.f32 %v342, %v230
        %v373 = vmul.f32 %v347, %v231
        %v374 = vmul.f32 %v352, %v230
        %v375 = vmul.f32 %v357, %v231
        %v376 = vmul.f32 %v362, %v230
        %v377 = vmul.f32 %v367, %v231
        %v378 = vadd.f32 %v370, %v371
        %v379 = vrot.slane %v378, 4
        %v380 = vadd.f32 %v378, %v379
        %v381 = vrot.slane %v380, 2
        %v382 = vadd.f32 %v380, %v381
        %v383 = vrot.slane %v382, 1
        %v384 = vadd.f32 %v382, %v383
        %v385 = vadd.f32 %v372, %v373
        %v386 = vrot.slane %v385, 4
        %v387 = vadd.f32 %v385, %v386
        %v388 = vrot.slane %v387, 2
        %v389 = vadd.f32 %v387, %v388
        %v390 = vrot.slane %v389, 1
        %v391 = vadd.f32 %v389, %v390
        %v392 = vadd.f32 %v374, %v375
        %v393 = vrot.slane %v392, 4
        %v394 = vadd.f32 %v392, %v393
        %v395 = vrot.slane %v394, 2
        %v396 = vadd.f32 %v394, %v395
        %v397 = vrot.slane %v396, 1
        %v398 = vadd.f32 %v396, %v397
        %v399 = vadd.f32 %v376, %v377
        %v400 = vrot.slane %v399, 4
        %v401 = vadd.f32 %v399, %v400
        %v402 = vrot.slane %v401, 2
        %v403 = vadd.f32 %v401, %v402
        %v404 = vrot.slane %v403, 1
        %v405 = vadd.f32 %v403, %v404
        %vm410 = vcmask 1041409
        %v411 = vsel %vm410, %v391, %v384
        %vm412 = vcmask 1042434
        %v413 = vsel %vm412, %v398, %v411
        %vm414 = vcmask 1043459
        %v415 = vsel %vm414, %v405, %v413
        %417 = vst [vmem:[%s156] sm:$0xf] %v415
        %s418 = sand.u32 %s87, 1
        %s419 = scalar_lea.sflag [#allocation3], %s418
        %s420 = sand.u32 %s87, 1
        %s421 = smul.addr %s420, 4
        %s422 = scalar_lea.vmem [#allocation2], %s421
        // Predicated region
        $region29: #{tpu_custom_call.1} parent=27 // pred_check
          %p423 = pneg %p97
        $region30: #{tpu_custom_call.1} parent=27 // pred_check_branch
          %425 = sbr.rel (%p423) target = $region32
        $region31: #{tpu_custom_call.1} parent=27 // pred_region
          %s427 = ssub.s32 64, 64
          %428 = vsyncadd %s419, %s427
          %s429 = sadd.s32 %s21, %s20
          %s430 = smul.addr %s429, 64
          %s431 = scalar_lea.hbm %s2, %s430
          %s433 = sshll.u32 %s422, 4
          %s434 = int_to_ptr.vmem [resolvable:$true] %s433
          %436 = dma.vmem_to_hbm [thread:$0]  %s434, 64, %s431, %s419
        $region32: #{tpu_custom_call.1} parent=27 // pred_fallthru
          _
      $region28: #{tpu_custom_call.1} parent=5 // pred_fallthru
        _
      %p437 = scmp.le.s32.totalorder 2, %s11
      // Predicated region
      $region33: #{tpu_custom_call.1} parent=5 // pred_check
        %p438 = pneg %p437
      $region34: #{tpu_custom_call.1} parent=5 // pred_check_branch
        %440 = sbr.rel (%p438) target = $region36
      $region35: #{tpu_custom_call.1} parent=5 // pred_region
        %s441 = ssub.s32 %s11, 2
        // Predicated region
        $region37: #{tpu_custom_call.1} parent=35 // pred_check
          %p442 = pneg %p103
        $region38: #{tpu_custom_call.1} parent=35 // pred_check_branch
          %444 = sbr.rel (%p442) target = $region40
        $region39: #{tpu_custom_call.1} parent=35 // pred_region
          %s445 = sand.u32 %s88, 1
          %s446 = scalar_lea.sflag [#allocation3], %s445
          %s447 = sand.u32 %s88, 1
          %s448 = smul.addr %s447, 4
          %s449 = scalar_lea.vmem [#allocation2], %s448
          %450 = dma.done %s446, 64
        $region40: #{tpu_custom_call.1} parent=35 // pred_fallthru
          _
      $region36: #{tpu_custom_call.1} parent=5 // pred_fallthru
        _
    $region6: #{tpu_custom_call.1} parent=1 // loop_footer
      %s15 = sadd.s32 1, %s11
    $region7: #{tpu_custom_call.1} parent=1 // loop_footer_branch
      %10 = sbr.rel target = $region3
    $region8: #{tpu_custom_call.1} parent=1 // loop_exit
      _
    %451 = vsyncpa [#allocation3], 1
    %s452 = scalar_lea.sflag [#allocation3], 1
    %453 = vsyncpa %s452, 1

</llo_original>
